<compile_context>
chip_gen: v5e
topology: v5e:2x2
jax: 0.10.0
libtpu: 0.0.40
codegen_flags: <defaults>
</compile_context>

<pallas_src>
import math
import functools

import jax
import jax.numpy as jnp
from jax.experimental import pallas as pl
from jax.experimental.pallas import tpu as pltpu


# ------------------------------- Pallas kernel -------------------------------

def _layernorm(t, gamma, beta, eps=1e-5):
    # two-pass form (mean, then variance of the centered value) to avoid the
    # E[x^2] - E[x]^2 cancellation flagged in review.
    mean = jnp.mean(t, axis=-1, keepdims=True)
    c = t - mean
    var = jnp.mean(c * c, axis=-1, keepdims=True)
    return c * jax.lax.rsqrt(var + eps) * gamma + beta


def encoder_layer_kernel(num_heads,
                         x_ref,
                         wqkv_ref, bqkv_ref, wo_ref, bo_ref,
                         w1_ref, b1_ref, w2_ref, b2_ref,
                         g1_ref, be1_ref, g2_ref, be2_ref,
                         out_ref,
                         ctx_ref):
    x = x_ref[...]                               # (S, D) f32, one batch element
    S, D = x.shape
    H = num_heads
    dh = D // H

    xb = x.astype(jnp.bfloat16)

    # ---------------- fused QKV projection: one (S,D)@(D,3D) matmul ----------
    # 1/sqrt(dh) is pre-folded into the Q columns of wqkv/bqkv at pack time.
    qkv = jnp.dot(xb, wqkv_ref[...],
                  preferred_element_type=jnp.float32) + bqkv_ref[0]   # (S, 3D)
    qkv_b = qkv.astype(jnp.bfloat16)

    # ---------------- per-head attention (per-batch -> no mask needed) -------
    # Per-head live set is only an (S, S) logits block; context is written
    # lane-contiguously into VMEM scratch so the output projection is a single
    # full-depth (S,D)@(D,D) matmul.
    for h in range(H):
        q = qkv_b[:, h * dh:(h + 1) * dh]                    # (S, dh)
        k = qkv_b[:, D + h * dh:D + (h + 1) * dh]            # (S, dh)
        v = qkv_b[:, 2 * D + h * dh:2 * D + (h + 1) * dh]    # (S, dh)

        logits = jnp.dot(q, k.T, preferred_element_type=jnp.float32)  # (S, S)
        logits = logits - jnp.max(logits, axis=-1, keepdims=True)
        p = jnp.exp(logits)
        p = p * pl.reciprocal(jnp.sum(p, axis=-1, keepdims=True), approx=True)

        ctx_ref[:, h * dh:(h + 1) * dh] = jnp.dot(
            p.astype(jnp.bfloat16), v, preferred_element_type=jnp.float32)

    # ---------------- single output projection (S,D)@(D,D) -------------------
    attn = jnp.dot(ctx_ref[...].astype(jnp.bfloat16), wo_ref[...],
                   preferred_element_type=jnp.float32) + bo_ref[0]

    # ---------------- residual + norm 1 --------------------------------------
    out1 = _layernorm(x + attn, g1_ref[0], be1_ref[0])

    # ---------------- feed-forward block -------------------------------------
    hid = jnp.maximum(
        jnp.dot(out1.astype(jnp.bfloat16), w1_ref[...],
                preferred_element_type=jnp.float32) + b1_ref[0], 0.0)
    ff = jnp.dot(hid.astype(jnp.bfloat16), w2_ref[...],
                 preferred_element_type=jnp.float32) + b2_ref[0]

    # ---------------- residual + norm 2 --------------------------------------
    out_ref[...] = _layernorm(out1 + ff, g2_ref[0], be2_ref[0])


# ------------------------------ wrapper / packing -----------------------------

def pack_params(p, num_heads):
    """Repack the canonical (pre-transposed) weights into the kernel layout."""
    D = p["wq"].shape[0]
    F = p["w1"].shape[1]
    dh = D // num_heads
    scale = 1.0 / math.sqrt(dh)

    # Fused QKV weight (D, 3D): Q columns pre-scaled by 1/sqrt(dh).
    wqkv = jnp.concatenate([p["wq"] * scale, p["wk"], p["wv"]],
                           axis=1).astype(jnp.bfloat16)                # (D, 3D)
    bqkv = jnp.concatenate([p["bq"] * scale, p["bk"], p["bv"]]
                           ).reshape(1, 3 * D).astype(jnp.float32)     # (1, 3D)
    return {
        "wqkv": wqkv, "bqkv": bqkv,
        "wo": p["wo"].astype(jnp.bfloat16),                            # (D, D)
        "bo": p["bo"].reshape(1, D).astype(jnp.float32),
        "w1": p["w1"].astype(jnp.bfloat16),
        "b1": p["b1"].reshape(1, F).astype(jnp.float32),
        "w2": p["w2"].astype(jnp.bfloat16),
        "b2": p["b2"].reshape(1, D).astype(jnp.float32),
        "g1": p["g1"].reshape(1, D).astype(jnp.float32),
        "be1": p["be1"].reshape(1, D).astype(jnp.float32),
        "g2": p["g2"].reshape(1, D).astype(jnp.float32),
        "be2": p["be2"].reshape(1, D).astype(jnp.float32),
    }


def encoder_layer_pallas(x, kp, num_heads):
    B, S, D = x.shape
    F = kp["w1"].shape[1]
    dh = D // num_heads

    x2 = x.reshape(B * S, D)                     # wrapper-side flatten (free)

    operands = (x2,
                kp["wqkv"], kp["bqkv"], kp["wo"], kp["bo"],
                kp["w1"], kp["b1"], kp["w2"], kp["b2"],
                kp["g1"], kp["be1"], kp["g2"], kp["be2"])

    # cost estimate kept in sync with the new (per-batch, no-bias) structure
    flops = B * (2 * S * D * 3 * D               # fused QKV projection
                 + num_heads * 4 * S * S * dh    # logits + ctx
                 + 2 * S * D * D                 # output projection
                 + 4 * S * D * F)                # FFN
    transcendentals = B * (num_heads * S * S + num_heads * S + 2 * S)
    bytes_accessed = (sum(int(a.size * a.dtype.itemsize) for a in operands)
                      + B * S * D * 4)

    def full_spec(a):                            # whole array, constant block
        zeros = (0,) * a.ndim
        # TODO(synk): pipeline_mode=pl.Buffered(1) at realistic D/F so these
        # constant-index operands are not double-buffered.
        return pl.BlockSpec(a.shape, lambda b, z=zeros: z)

    in_specs = ([pl.BlockSpec((S, D), lambda b: (b, 0))]
                + [full_spec(a) for a in operands[1:]])
    out_spec = pl.BlockSpec((S, D), lambda b: (b, 0))

    kernel = functools.partial(encoder_layer_kernel, num_heads)
    out2d = pl.pallas_call(
        kernel,
        out_shape=jax.ShapeDtypeStruct((B * S, D), jnp.float32),
        grid=(B,),                               # per-batch steps; >=2 -> both
        in_specs=in_specs,                       # v7x TensorCores usable
        out_specs=out_spec,
        scratch_shapes=[pltpu.VMEM((S, D), jnp.float32)],   # per-head ctx slab
        compiler_params=pltpu.CompilerParams(
            dimension_semantics=("parallel",),
            # 48 MiB: fits v7x's 64 MiB physical VMEM with headroom; also valid
            # (and generous) on v5e/v6e which have 128 MiB physical.
            vmem_limit_bytes=48 * 1024 * 1024),
        cost_estimate=pl.CostEstimate(flops=int(flops),
                                      transcendentals=int(transcendentals),
                                      bytes_accessed=int(bytes_accessed)),
    )(*operands)
    return out2d.reshape(B, S, D)


# ------------------------------ params / reference ----------------------------

def init_layer_params(key, d_model, dff):
    ks = jax.random.split(key, 16)
    s = 0.02
    n = jax.random.normal
    return {
        "wq": s * n(ks[0], (d_model, d_model), jnp.float32),
        "bq": s * n(ks[1], (d_model,), jnp.float32),
        "wk": s * n(ks[2], (d_model, d_model), jnp.float32),
        "bk": s * n(ks[3], (d_model,), jnp.float32),
        "wv": s * n(ks[4], (d_model, d_model), jnp.float32),
        "bv": s * n(ks[5], (d_model,), jnp.float32),
        "wo": s * n(ks[6], (d_model, d_model), jnp.float32),
        "bo": s * n(ks[7], (d_model,), jnp.float32),
        "w1": s * n(ks[8], (d_model, dff), jnp.float32),
        "b1": s * n(ks[9], (dff,), jnp.float32),
        "w2": s * n(ks[10], (dff, d_model), jnp.float32),
        "b2": s * n(ks[11], (d_model,), jnp.float32),
        "g1": 1.0 + 0.1 * n(ks[12], (d_model,), jnp.float32),
        "be1": 0.1 * n(ks[13], (d_model,), jnp.float32),
        "g2": 1.0 + 0.1 * n(ks[14], (d_model,), jnp.float32),
        "be2": 0.1 * n(ks[15], (d_model,), jnp.float32),
    }


def encoder_layer_ref(x, p, num_heads):
    """Pure-JAX f32 reference mirroring the PyTorch EncoderLayer forward."""
    B, S, D = x.shape
    dh = D // num_heads
    q = x @ p["wq"] + p["bq"]
    k = x @ p["wk"] + p["bk"]
    v = x @ p["wv"] + p["bv"]

    def split(t):
        return t.reshape(B, S, num_heads, dh).transpose(0, 2, 1, 3)

    qh, kh, vh = split(q), split(k), split(v)
    logits = jnp.einsum("bhsd,bhtd->bhst", qh, kh) / math.sqrt(dh)
    w = jax.nn.softmax(logits, axis=-1)
    attn = jnp.einsum("bhst,bhtd->bhsd", w, vh).transpose(0, 2, 1, 3).reshape(B, S, D)
    attn = attn @ p["wo"] + p["bo"]

    def ln(t, g, b):
        m = t.mean(-1, keepdims=True)
        va = ((t - m) ** 2).mean(-1, keepdims=True)
        return (t - m) / jnp.sqrt(va + 1e-5) * g + b

    out1 = ln(x + attn, p["g1"], p["be1"])
    ff = jnp.maximum(out1 @ p["w1"] + p["b1"], 0.0) @ p["w2"] + p["b2"]
    return ln(out1 + ff, p["g2"], p["be2"])


# ------------------------------------ main ------------------------------------

if __name__ == "__main__":
    d_model = 32
    num_heads = 4
    dff = 64
    batch = 2
    seq = 8

    root = jax.random.PRNGKey(0)
    k_x, k_p = jax.random.split(root)

    x = jax.random.normal(k_x, (batch, seq, d_model), jnp.float32)
    params = init_layer_params(k_p, d_model, dff)
    kernel_params = pack_params(params, num_heads)

    out = encoder_layer_pallas(x, kernel_params, num_heads)
    out = jax.block_until_ready(out)

    ref = encoder_layer_ref(x, params, num_heads)
    assert out.shape == (batch, seq, d_model)
    max_err = float(jnp.max(jnp.abs(out - ref)))
    # bf16 MXU operands (weights cast at pack time) with f32 accumulation and
    # approx reciprocal in the softmax -> loosened tolerance vs the f32 ref.
    assert jnp.allclose(out, ref, atol=2e-2, rtol=2e-2), f"mismatch vs reference: {max_err}"

    print("KERNEL_OK")
</pallas_src>

<mosaic_0001>
module attributes {stable_mosaic.version = 11 : i64} {
  func.func @encoder_layer_kernel(%arg0: i32, %arg1: memref<8x32xf32, #tpu.memory_space<vmem>>, %arg2: memref<32x96xbf16, #tpu.memory_space<vmem>>, %arg3: memref<1x96xf32, #tpu.memory_space<vmem>>, %arg4: memref<32x32xbf16, #tpu.memory_space<vmem>>, %arg5: memref<1x32xf32, #tpu.memory_space<vmem>>, %arg6: memref<32x64xbf16, #tpu.memory_space<vmem>>, %arg7: memref<1x64xf32, #tpu.memory_space<vmem>>, %arg8: memref<64x32xbf16, #tpu.memory_space<vmem>>, %arg9: memref<1x32xf32, #tpu.memory_space<vmem>>, %arg10: memref<1x32xf32, #tpu.memory_space<vmem>>, %arg11: memref<1x32xf32, #tpu.memory_space<vmem>>, %arg12: memref<1x32xf32, #tpu.memory_space<vmem>>, %arg13: memref<1x32xf32, #tpu.memory_space<vmem>>, %arg14: memref<8x32xf32, #tpu.memory_space<vmem>>, %arg15: memref<8x32xf32, #tpu.memory_space<vmem>>) attributes {dimension_semantics = [#tpu.dimension_semantics<parallel>], iteration_bounds = array<i64: 2>, scalar_prefetch = 0 : i64, scratch_operands = 1 : i64, tpu.core_type = #tpu.core_type<tc>, window_params = [{transform_indices = @transform_0, window_bounds = array<i64: 8, 32>}, {pipeline_mode = #tpu.pipeline_mode<synchronous>, transform_indices = @transform_1, window_bounds = array<i64: 32, 96>}, {pipeline_mode = #tpu.pipeline_mode<synchronous>, transform_indices = @transform_2, window_bounds = array<i64: 1, 96>}, {pipeline_mode = #tpu.pipeline_mode<synchronous>, transform_indices = @transform_3, window_bounds = array<i64: 32, 32>}, {pipeline_mode = #tpu.pipeline_mode<synchronous>, transform_indices = @transform_4, window_bounds = array<i64: 1, 32>}, {pipeline_mode = #tpu.pipeline_mode<synchronous>, transform_indices = @transform_5, window_bounds = array<i64: 32, 64>}, {pipeline_mode = #tpu.pipeline_mode<synchronous>, transform_indices = @transform_6, window_bounds = array<i64: 1, 64>}, {pipeline_mode = #tpu.pipeline_mode<synchronous>, transform_indices = @transform_7, window_bounds = array<i64: 64, 32>}, {pipeline_mode = #tpu.pipeline_mode<synchronous>, transform_indices = @transform_8, window_bounds = array<i64: 1, 32>}, {pipeline_mode = #tpu.pipeline_mode<synchronous>, transform_indices = @transform_9, window_bounds = array<i64: 1, 32>}, {pipeline_mode = #tpu.pipeline_mode<synchronous>, transform_indices = @transform_10, window_bounds = array<i64: 1, 32>}, {pipeline_mode = #tpu.pipeline_mode<synchronous>, transform_indices = @transform_11, window_bounds = array<i64: 1, 32>}, {pipeline_mode = #tpu.pipeline_mode<synchronous>, transform_indices = @transform_12, window_bounds = array<i64: 1, 32>}, {transform_indices = @transform_13, window_bounds = array<i64: 8, 32>}]} {
    %c0 = arith.constant 0 : index
    %c0_0 = arith.constant 0 : index
    %0 = vector.load %arg1[%c0, %c0_0] : memref<8x32xf32, #tpu.memory_space<vmem>>, vector<8x32xf32>
    %1 = arith.truncf %0 : vector<8x32xf32> to vector<8x32xbf16>
    %c0_1 = arith.constant 0 : index
    %c0_2 = arith.constant 0 : index
    %2 = vector.load %arg2[%c0_1, %c0_2] : memref<32x96xbf16, #tpu.memory_space<vmem>>, vector<32x96xbf16>
    %cst = arith.constant dense<0.000000e+00> : vector<8x96xf32>
    %3 = tpu.matmul %1, %2, %cst {dimension_numbers = #tpu.dot_dimension_numbers<[1], [0], [0], [1], [0, 0, 1, 1], [], []>} : vector<8x32xbf16>, vector<32x96xbf16>, vector<8x96xf32> -> vector<8x96xf32>
    %c0_3 = arith.constant 0 : index
    %c0_4 = arith.constant 0 : index
    %4 = vector.load %arg3[%c0_3, %c0_4] : memref<1x96xf32, #tpu.memory_space<vmem>>, vector<1x96xf32>
    %5 = vector.shape_cast %4 : vector<1x96xf32> to vector<96xf32>
    %6 = vector.shape_cast %5 : vector<96xf32> to vector<1x96xf32>
    %7 = vector.broadcast %6 : vector<1x96xf32> to vector<8x96xf32>
    %8 = arith.addf %3, %7 : vector<8x96xf32>
    %9 = arith.truncf %8 : vector<8x96xf32> to vector<8x96xbf16>
    %10 = vector.extract_strided_slice %9 {offsets = [0, 0], sizes = [8, 8], strides = [1, 1]} : vector<8x96xbf16> to vector<8x8xbf16>
    %11 = vector.extract_strided_slice %9 {offsets = [0, 32], sizes = [8, 8], strides = [1, 1]} : vector<8x96xbf16> to vector<8x8xbf16>
    %12 = vector.extract_strided_slice %9 {offsets = [0, 64], sizes = [8, 8], strides = [1, 1]} : vector<8x96xbf16> to vector<8x8xbf16>
    %13 = tpu.transpose %11, [1, 0] : vector<8x8xbf16> -> vector<8x8xbf16>
    %cst_5 = arith.constant dense<0.000000e+00> : vector<8x8xf32>
    %14 = tpu.matmul %10, %13, %cst_5 {dimension_numbers = #tpu.dot_dimension_numbers<[1], [0], [0], [1], [0, 0, 1, 1], [], []>} : vector<8x8xbf16>, vector<8x8xbf16>, vector<8x8xf32> -> vector<8x8xf32>
    %cst_6 = arith.constant dense<0xFF800000> : vector<8xf32>
    %15 = vector.multi_reduction <maximumf>, %14, %cst_6 [1] : vector<8x8xf32> to vector<8xf32>
    %16 = vector.shape_cast %15 : vector<8xf32> to vector<8x1xf32>
    %17 = vector.broadcast %16 : vector<8x1xf32> to vector<8x8xf32>
    %18 = arith.subf %14, %17 : vector<8x8xf32>
    %19 = math.exp %18 : vector<8x8xf32>
    %cst_7 = arith.constant dense<0.000000e+00> : vector<8xf32>
    %20 = vector.multi_reduction <add>, %19, %cst_7 [1] : vector<8x8xf32> to vector<8xf32>
    %21 = vector.shape_cast %20 : vector<8xf32> to vector<8x1xf32>
    %22 = tpu.reciprocal %21 {approx = true} : vector<8x1xf32> -> vector<8x1xf32>
    %23 = vector.broadcast %22 : vector<8x1xf32> to vector<8x8xf32>
    %24 = arith.mulf %19, %23 : vector<8x8xf32>
    %25 = arith.truncf %24 : vector<8x8xf32> to vector<8x8xbf16>
    %cst_8 = arith.constant dense<0.000000e+00> : vector<8x8xf32>
    %26 = tpu.matmul %25, %12, %cst_8 {dimension_numbers = #tpu.dot_dimension_numbers<[1], [0], [0], [1], [0, 0, 1, 1], [], []>} : vector<8x8xbf16>, vector<8x8xbf16>, vector<8x8xf32> -> vector<8x8xf32>
    %c0_9 = arith.constant 0 : index
    %c0_10 = arith.constant 0 : index
    %27 = vector.load %arg15[%c0_9, %c0_10] : memref<8x32xf32, #tpu.memory_space<vmem>>, vector<8x8xf32>
    tpu.vector_store %arg15[%c0_9, %c0_10], %26 {strides = array<i32>} : memref<8x32xf32, #tpu.memory_space<vmem>>, vector<8x8xf32>,
    %28 = vector.extract_strided_slice %9 {offsets = [0, 8], sizes = [8, 8], strides = [1, 1]} : vector<8x96xbf16> to vector<8x8xbf16>
    %29 = vector.extract_strided_slice %9 {offsets = [0, 40], sizes = [8, 8], strides = [1, 1]} : vector<8x96xbf16> to vector<8x8xbf16>
    %30 = vector.extract_strided_slice %9 {offsets = [0, 72], sizes = [8, 8], strides = [1, 1]} : vector<8x96xbf16> to vector<8x8xbf16>
    %31 = tpu.transpose %29, [1, 0] : vector<8x8xbf16> -> vector<8x8xbf16>
    %cst_11 = arith.constant dense<0.000000e+00> : vector<8x8xf32>
    %32 = tpu.matmul %28, %31, %cst_11 {dimension_numbers = #tpu.dot_dimension_numbers<[1], [0], [0], [1], [0, 0, 1, 1], [], []>} : vector<8x8xbf16>, vector<8x8xbf16>, vector<8x8xf32> -> vector<8x8xf32>
    %cst_12 = arith.constant dense<0xFF800000> : vector<8xf32>
    %33 = vector.multi_reduction <maximumf>, %32, %cst_12 [1] : vector<8x8xf32> to vector<8xf32>
    %34 = vector.shape_cast %33 : vector<8xf32> to vector<8x1xf32>
    %35 = vector.broadcast %34 : vector<8x1xf32> to vector<8x8xf32>
    %36 = arith.subf %32, %35 : vector<8x8xf32>
    %37 = math.exp %36 : vector<8x8xf32>
    %cst_13 = arith.constant dense<0.000000e+00> : vector<8xf32>
    %38 = vector.multi_reduction <add>, %37, %cst_13 [1] : vector<8x8xf32> to vector<8xf32>
    %39 = vector.shape_cast %38 : vector<8xf32> to vector<8x1xf32>
    %40 = tpu.reciprocal %39 {approx = true} : vector<8x1xf32> -> vector<8x1xf32>
    %41 = vector.broadcast %40 : vector<8x1xf32> to vector<8x8xf32>
    %42 = arith.mulf %37, %41 : vector<8x8xf32>
    %43 = arith.truncf %42 : vector<8x8xf32> to vector<8x8xbf16>
    %cst_14 = arith.constant dense<0.000000e+00> : vector<8x8xf32>
    %44 = tpu.matmul %43, %30, %cst_14 {dimension_numbers = #tpu.dot_dimension_numbers<[1], [0], [0], [1], [0, 0, 1, 1], [], []>} : vector<8x8xbf16>, vector<8x8xbf16>, vector<8x8xf32> -> vector<8x8xf32>
    %c0_15 = arith.constant 0 : index
    %c8 = arith.constant 8 : index
    %45 = vector.load %arg15[%c0_15, %c8] : memref<8x32xf32, #tpu.memory_space<vmem>>, vector<8x8xf32>
    tpu.vector_store %arg15[%c0_15, %c8], %44 {strides = array<i32>} : memref<8x32xf32, #tpu.memory_space<vmem>>, vector<8x8xf32>,
    %46 = vector.extract_strided_slice %9 {offsets = [0, 16], sizes = [8, 8], strides = [1, 1]} : vector<8x96xbf16> to vector<8x8xbf16>
    %47 = vector.extract_strided_slice %9 {offsets = [0, 48], sizes = [8, 8], strides = [1, 1]} : vector<8x96xbf16> to vector<8x8xbf16>
    %48 = vector.extract_strided_slice %9 {offsets = [0, 80], sizes = [8, 8], strides = [1, 1]} : vector<8x96xbf16> to vector<8x8xbf16>
    %49 = tpu.transpose %47, [1, 0] : vector<8x8xbf16> -> vector<8x8xbf16>
    %cst_16 = arith.constant dense<0.000000e+00> : vector<8x8xf32>
    %50 = tpu.matmul %46, %49, %cst_16 {dimension_numbers = #tpu.dot_dimension_numbers<[1], [0], [0], [1], [0, 0, 1, 1], [], []>} : vector<8x8xbf16>, vector<8x8xbf16>, vector<8x8xf32> -> vector<8x8xf32>
    %cst_17 = arith.constant dense<0xFF800000> : vector<8xf32>
    %51 = vector.multi_reduction <maximumf>, %50, %cst_17 [1] : vector<8x8xf32> to vector<8xf32>
    %52 = vector.shape_cast %51 : vector<8xf32> to vector<8x1xf32>
    %53 = vector.broadcast %52 : vector<8x1xf32> to vector<8x8xf32>
    %54 = arith.subf %50, %53 : vector<8x8xf32>
    %55 = math.exp %54 : vector<8x8xf32>
    %cst_18 = arith.constant dense<0.000000e+00> : vector<8xf32>
    %56 = vector.multi_reduction <add>, %55, %cst_18 [1] : vector<8x8xf32> to vector<8xf32>
    %57 = vector.shape_cast %56 : vector<8xf32> to vector<8x1xf32>
    %58 = tpu.reciprocal %57 {approx = true} : vector<8x1xf32> -> vector<8x1xf32>
    %59 = vector.broadcast %58 : vector<8x1xf32> to vector<8x8xf32>
    %60 = arith.mulf %55, %59 : vector<8x8xf32>
    %61 = arith.truncf %60 : vector<8x8xf32> to vector<8x8xbf16>
    %cst_19 = arith.constant dense<0.000000e+00> : vector<8x8xf32>
    %62 = tpu.matmul %61, %48, %cst_19 {dimension_numbers = #tpu.dot_dimension_numbers<[1], [0], [0], [1], [0, 0, 1, 1], [], []>} : vector<8x8xbf16>, vector<8x8xbf16>, vector<8x8xf32> -> vector<8x8xf32>
    %c0_20 = arith.constant 0 : index
    %c16 = arith.constant 16 : index
    %63 = vector.load %arg15[%c0_20, %c16] : memref<8x32xf32, #tpu.memory_space<vmem>>, vector<8x8xf32>
    tpu.vector_store %arg15[%c0_20, %c16], %62 {strides = array<i32>} : memref<8x32xf32, #tpu.memory_space<vmem>>, vector<8x8xf32>,
    %64 = vector.extract_strided_slice %9 {offsets = [0, 24], sizes = [8, 8], strides = [1, 1]} : vector<8x96xbf16> to vector<8x8xbf16>
    %65 = vector.extract_strided_slice %9 {offsets = [0, 56], sizes = [8, 8], strides = [1, 1]} : vector<8x96xbf16> to vector<8x8xbf16>
    %66 = vector.extract_strided_slice %9 {offsets = [0, 88], sizes = [8, 8], strides = [1, 1]} : vector<8x96xbf16> to vector<8x8xbf16>
    %67 = tpu.transpose %65, [1, 0] : vector<8x8xbf16> -> vector<8x8xbf16>
    %cst_21 = arith.constant dense<0.000000e+00> : vector<8x8xf32>
    %68 = tpu.matmul %64, %67, %cst_21 {dimension_numbers = #tpu.dot_dimension_numbers<[1], [0], [0], [1], [0, 0, 1, 1], [], []>} : vector<8x8xbf16>, vector<8x8xbf16>, vector<8x8xf32> -> vector<8x8xf32>
    %cst_22 = arith.constant dense<0xFF800000> : vector<8xf32>
    %69 = vector.multi_reduction <maximumf>, %68, %cst_22 [1] : vector<8x8xf32> to vector<8xf32>
    %70 = vector.shape_cast %69 : vector<8xf32> to vector<8x1xf32>
    %71 = vector.broadcast %70 : vector<8x1xf32> to vector<8x8xf32>
    %72 = arith.subf %68, %71 : vector<8x8xf32>
    %73 = math.exp %72 : vector<8x8xf32>
    %cst_23 = arith.constant dense<0.000000e+00> : vector<8xf32>
    %74 = vector.multi_reduction <add>, %73, %cst_23 [1] : vector<8x8xf32> to vector<8xf32>
    %75 = vector.shape_cast %74 : vector<8xf32> to vector<8x1xf32>
    %76 = tpu.reciprocal %75 {approx = true} : vector<8x1xf32> -> vector<8x1xf32>
    %77 = vector.broadcast %76 : vector<8x1xf32> to vector<8x8xf32>
    %78 = arith.mulf %73, %77 : vector<8x8xf32>
    %79 = arith.truncf %78 : vector<8x8xf32> to vector<8x8xbf16>
    %cst_24 = arith.constant dense<0.000000e+00> : vector<8x8xf32>
    %80 = tpu.matmul %79, %66, %cst_24 {dimension_numbers = #tpu.dot_dimension_numbers<[1], [0], [0], [1], [0, 0, 1, 1], [], []>} : vector<8x8xbf16>, vector<8x8xbf16>, vector<8x8xf32> -> vector<8x8xf32>
    %c0_25 = arith.constant 0 : index
    %c24 = arith.constant 24 : index
    %81 = vector.load %arg15[%c0_25, %c24] : memref<8x32xf32, #tpu.memory_space<vmem>>, vector<8x8xf32>
    tpu.vector_store %arg15[%c0_25, %c24], %80 {strides = array<i32>} : memref<8x32xf32, #tpu.memory_space<vmem>>, vector<8x8xf32>,
    %c0_26 = arith.constant 0 : index
    %c0_27 = arith.constant 0 : index
    %82 = vector.load %arg15[%c0_26, %c0_27] : memref<8x32xf32, #tpu.memory_space<vmem>>, vector<8x32xf32>
    %83 = arith.truncf %82 : vector<8x32xf32> to vector<8x32xbf16>
    %c0_28 = arith.constant 0 : index
    %c0_29 = arith.constant 0 : index
    %84 = vector.load %arg4[%c0_28, %c0_29] : memref<32x32xbf16, #tpu.memory_space<vmem>>, vector<32x32xbf16>
    %cst_30 = arith.constant dense<0.000000e+00> : vector<8x32xf32>
    %85 = tpu.matmul %83, %84, %cst_30 {dimension_numbers = #tpu.dot_dimension_numbers<[1], [0], [0], [1], [0, 0, 1, 1], [], []>} : vector<8x32xbf16>, vector<32x32xbf16>, vector<8x32xf32> -> vector<8x32xf32>
    %c0_31 = arith.constant 0 : index
    %c0_32 = arith.constant 0 : index
    %86 = vector.load %arg5[%c0_31, %c0_32] : memref<1x32xf32, #tpu.memory_space<vmem>>, vector<1x32xf32>
    %87 = vector.shape_cast %86 : vector<1x32xf32> to vector<32xf32>
    %88 = vector.shape_cast %87 : vector<32xf32> to vector<1x32xf32>
    %89 = vector.broadcast %88 : vector<1x32xf32> to vector<8x32xf32>
    %90 = arith.addf %85, %89 : vector<8x32xf32>
    %91 = arith.addf %0, %90 : vector<8x32xf32>
    %c0_33 = arith.constant 0 : index
    %c0_34 = arith.constant 0 : index
    %92 = vector.load %arg10[%c0_33, %c0_34] : memref<1x32xf32, #tpu.memory_space<vmem>>, vector<1x32xf32>
    %93 = vector.shape_cast %92 : vector<1x32xf32> to vector<32xf32>
    %c0_35 = arith.constant 0 : index
    %c0_36 = arith.constant 0 : index
    %94 = vector.load %arg11[%c0_35, %c0_36] : memref<1x32xf32, #tpu.memory_space<vmem>>, vector<1x32xf32>
    %95 = vector.shape_cast %94 : vector<1x32xf32> to vector<32xf32>
    %cst_37 = arith.constant dense<0.000000e+00> : vector<8xf32>
    %96 = vector.multi_reduction <add>, %91, %cst_37 [1] : vector<8x32xf32> to vector<8xf32>
    %97 = vector.shape_cast %96 : vector<8xf32> to vector<8x1xf32>
    %cst_38 = arith.constant 3.200000e+01 : f32
    %98 = vector.broadcast %cst_38 : f32 to vector<8x1xf32>
    %99 = arith.divf %97, %98 : vector<8x1xf32>
    %100 = vector.broadcast %99 : vector<8x1xf32> to vector<8x32xf32>
    %101 = arith.subf %91, %100 : vector<8x32xf32>
    %102 = arith.mulf %101, %101 : vector<8x32xf32>
    %cst_39 = arith.constant dense<0.000000e+00> : vector<8xf32>
    %103 = vector.multi_reduction <add>, %102, %cst_39 [1] : vector<8x32xf32> to vector<8xf32>
    %104 = vector.shape_cast %103 : vector<8xf32> to vector<8x1xf32>
    %cst_40 = arith.constant 3.200000e+01 : f32
    %105 = vector.broadcast %cst_40 : f32 to vector<8x1xf32>
    %106 = arith.divf %104, %105 : vector<8x1xf32>
    %cst_41 = arith.constant 9.99999974E-6 : f32
    %107 = vector.broadcast %cst_41 : f32 to vector<8x1xf32>
    %108 = arith.addf %106, %107 : vector<8x1xf32>
    %109 = math.rsqrt %108 : vector<8x1xf32>
    %110 = vector.broadcast %109 : vector<8x1xf32> to vector<8x32xf32>
    %111 = arith.mulf %101, %110 : vector<8x32xf32>
    %112 = vector.shape_cast %93 : vector<32xf32> to vector<1x32xf32>
    %113 = vector.broadcast %112 : vector<1x32xf32> to vector<8x32xf32>
    %114 = arith.mulf %111, %113 : vector<8x32xf32>
    %115 = vector.shape_cast %95 : vector<32xf32> to vector<1x32xf32>
    %116 = vector.broadcast %115 : vector<1x32xf32> to vector<8x32xf32>
    %117 = arith.addf %114, %116 : vector<8x32xf32>
    %118 = arith.truncf %117 : vector<8x32xf32> to vector<8x32xbf16>
    %c0_42 = arith.constant 0 : index
    %c0_43 = arith.constant 0 : index
    %119 = vector.load %arg6[%c0_42, %c0_43] : memref<32x64xbf16, #tpu.memory_space<vmem>>, vector<32x64xbf16>
    %cst_44 = arith.constant dense<0.000000e+00> : vector<8x64xf32>
    %120 = tpu.matmul %118, %119, %cst_44 {dimension_numbers = #tpu.dot_dimension_numbers<[1], [0], [0], [1], [0, 0, 1, 1], [], []>} : vector<8x32xbf16>, vector<32x64xbf16>, vector<8x64xf32> -> vector<8x64xf32>
    %c0_45 = arith.constant 0 : index
    %c0_46 = arith.constant 0 : index
    %121 = vector.load %arg7[%c0_45, %c0_46] : memref<1x64xf32, #tpu.memory_space<vmem>>, vector<1x64xf32>
    %122 = vector.shape_cast %121 : vector<1x64xf32> to vector<64xf32>
    %123 = vector.shape_cast %122 : vector<64xf32> to vector<1x64xf32>
    %124 = vector.broadcast %123 : vector<1x64xf32> to vector<8x64xf32>
    %125 = arith.addf %120, %124 : vector<8x64xf32>
    %cst_47 = arith.constant 0.000000e+00 : f32
    %126 = vector.broadcast %cst_47 : f32 to vector<8x64xf32>
    %127 = arith.maximumf %125, %126 : vector<8x64xf32>
    %128 = arith.truncf %127 : vector<8x64xf32> to vector<8x64xbf16>
    %c0_48 = arith.constant 0 : index
    %c0_49 = arith.constant 0 : index
    %129 = vector.load %arg8[%c0_48, %c0_49] : memref<64x32xbf16, #tpu.memory_space<vmem>>, vector<64x32xbf16>
    %cst_50 = arith.constant dense<0.000000e+00> : vector<8x32xf32>
    %130 = tpu.matmul %128, %129, %cst_50 {dimension_numbers = #tpu.dot_dimension_numbers<[1], [0], [0], [1], [0, 0, 1, 1], [], []>} : vector<8x64xbf16>, vector<64x32xbf16>, vector<8x32xf32> -> vector<8x32xf32>
    %c0_51 = arith.constant 0 : index
    %c0_52 = arith.constant 0 : index
    %131 = vector.load %arg9[%c0_51, %c0_52] : memref<1x32xf32, #tpu.memory_space<vmem>>, vector<1x32xf32>
    %132 = vector.shape_cast %131 : vector<1x32xf32> to vector<32xf32>
    %133 = vector.shape_cast %132 : vector<32xf32> to vector<1x32xf32>
    %134 = vector.broadcast %133 : vector<1x32xf32> to vector<8x32xf32>
    %135 = arith.addf %130, %134 : vector<8x32xf32>
    %136 = arith.addf %117, %135 : vector<8x32xf32>
    %c0_53 = arith.constant 0 : index
    %c0_54 = arith.constant 0 : index
    %137 = vector.load %arg12[%c0_53, %c0_54] : memref<1x32xf32, #tpu.memory_space<vmem>>, vector<1x32xf32>
    %138 = vector.shape_cast %137 : vector<1x32xf32> to vector<32xf32>
    %c0_55 = arith.constant 0 : index
    %c0_56 = arith.constant 0 : index
    %139 = vector.load %arg13[%c0_55, %c0_56] : memref<1x32xf32, #tpu.memory_space<vmem>>, vector<1x32xf32>
    %140 = vector.shape_cast %139 : vector<1x32xf32> to vector<32xf32>
    %cst_57 = arith.constant dense<0.000000e+00> : vector<8xf32>
    %141 = vector.multi_reduction <add>, %136, %cst_57 [1] : vector<8x32xf32> to vector<8xf32>
    %142 = vector.shape_cast %141 : vector<8xf32> to vector<8x1xf32>
    %cst_58 = arith.constant 3.200000e+01 : f32
    %143 = vector.broadcast %cst_58 : f32 to vector<8x1xf32>
    %144 = arith.divf %142, %143 : vector<8x1xf32>
    %145 = vector.broadcast %144 : vector<8x1xf32> to vector<8x32xf32>
    %146 = arith.subf %136, %145 : vector<8x32xf32>
    %147 = arith.mulf %146, %146 : vector<8x32xf32>
    %cst_59 = arith.constant dense<0.000000e+00> : vector<8xf32>
    %148 = vector.multi_reduction <add>, %147, %cst_59 [1] : vector<8x32xf32> to vector<8xf32>
    %149 = vector.shape_cast %148 : vector<8xf32> to vector<8x1xf32>
    %cst_60 = arith.constant 3.200000e+01 : f32
    %150 = vector.broadcast %cst_60 : f32 to vector<8x1xf32>
    %151 = arith.divf %149, %150 : vector<8x1xf32>
    %cst_61 = arith.constant 9.99999974E-6 : f32
    %152 = vector.broadcast %cst_61 : f32 to vector<8x1xf32>
    %153 = arith.addf %151, %152 : vector<8x1xf32>
    %154 = math.rsqrt %153 : vector<8x1xf32>
    %155 = vector.broadcast %154 : vector<8x1xf32> to vector<8x32xf32>
    %156 = arith.mulf %146, %155 : vector<8x32xf32>
    %157 = vector.shape_cast %138 : vector<32xf32> to vector<1x32xf32>
    %158 = vector.broadcast %157 : vector<1x32xf32> to vector<8x32xf32>
    %159 = arith.mulf %156, %158 : vector<8x32xf32>
    %160 = vector.shape_cast %140 : vector<32xf32> to vector<1x32xf32>
    %161 = vector.broadcast %160 : vector<1x32xf32> to vector<8x32xf32>
    %162 = arith.addf %159, %161 : vector<8x32xf32>
    %c0_62 = arith.constant 0 : index
    %c0_63 = arith.constant 0 : index
    %163 = vector.load %arg14[%c0_62, %c0_63] : memref<8x32xf32, #tpu.memory_space<vmem>>, vector<8x32xf32>
    tpu.vector_store %arg14[%c0_62, %c0_63], %162 {strides = array<i32>} : memref<8x32xf32, #tpu.memory_space<vmem>>, vector<8x32xf32>,
    return
  }
  func.func @transform_0(%arg0: i32) -> (i32, i32) {
    %c0_i32 = arith.constant 0 : i32
    %c0_i32_0 = arith.constant 0 : i32
    return %arg0, %c0_i32 : i32, i32
  }
  func.func @transform_1(%arg0: i32) -> (i32, i32) {
    %c0_i32 = arith.constant 0 : i32
    %c0_i32_0 = arith.constant 0 : i32
    %c0_i32_1 = arith.constant 0 : i32
    return %c0_i32, %c0_i32_0 : i32, i32
  }
  func.func @transform_2(%arg0: i32) -> (i32, i32) {
    %c0_i32 = arith.constant 0 : i32
    %c0_i32_0 = arith.constant 0 : i32
    %c0_i32_1 = arith.constant 0 : i32
    return %c0_i32, %c0_i32_0 : i32, i32
  }
  func.func @transform_3(%arg0: i32) -> (i32, i32) {
    %c0_i32 = arith.constant 0 : i32
    %c0_i32_0 = arith.constant 0 : i32
    %c0_i32_1 = arith.constant 0 : i32
    return %c0_i32, %c0_i32_0 : i32, i32
  }
  func.func @transform_4(%arg0: i32) -> (i32, i32) {
    %c0_i32 = arith.constant 0 : i32
    %c0_i32_0 = arith.constant 0 : i32
    %c0_i32_1 = arith.constant 0 : i32
    return %c0_i32, %c0_i32_0 : i32, i32
  }
  func.func @transform_5(%arg0: i32) -> (i32, i32) {
    %c0_i32 = arith.constant 0 : i32
    %c0_i32_0 = arith.constant 0 : i32
    %c0_i32_1 = arith.constant 0 : i32
    return %c0_i32, %c0_i32_0 : i32, i32
  }
  func.func @transform_6(%arg0: i32) -> (i32, i32) {
    %c0_i32 = arith.constant 0 : i32
    %c0_i32_0 = arith.constant 0 : i32
    %c0_i32_1 = arith.constant 0 : i32
    return %c0_i32, %c0_i32_0 : i32, i32
  }
  func.func @transform_7(%arg0: i32) -> (i32, i32) {
    %c0_i32 = arith.constant 0 : i32
    %c0_i32_0 = arith.constant 0 : i32
    %c0_i32_1 = arith.constant 0 : i32
    return %c0_i32, %c0_i32_0 : i32, i32
  }
  func.func @transform_8(%arg0: i32) -> (i32, i32) {
    %c0_i32 = arith.constant 0 : i32
    %c0_i32_0 = arith.constant 0 : i32
    %c0_i32_1 = arith.constant 0 : i32
    return %c0_i32, %c0_i32_0 : i32, i32
  }
  func.func @transform_9(%arg0: i32) -> (i32, i32) {
    %c0_i32 = arith.constant 0 : i32
    %c0_i32_0 = arith.constant 0 : i32
    %c0_i32_1 = arith.constant 0 : i32
    return %c0_i32, %c0_i32_0 : i32, i32
  }
  func.func @transform_10(%arg0: i32) -> (i32, i32) {
    %c0_i32 = arith.constant 0 : i32
    %c0_i32_0 = arith.constant 0 : i32
    %c0_i32_1 = arith.constant 0 : i32
    return %c0_i32, %c0_i32_0 : i32, i32
  }
  func.func @transform_11(%arg0: i32) -> (i32, i32) {
    %c0_i32 = arith.constant 0 : i32
    %c0_i32_0 = arith.constant 0 : i32
    %c0_i32_1 = arith.constant 0 : i32
    return %c0_i32, %c0_i32_0 : i32, i32
  }
  func.func @transform_12(%arg0: i32) -> (i32, i32) {
    %c0_i32 = arith.constant 0 : i32
    %c0_i32_0 = arith.constant 0 : i32
    %c0_i32_1 = arith.constant 0 : i32
    return %c0_i32, %c0_i32_0 : i32, i32
  }
  func.func @transform_13(%arg0: i32) -> (i32, i32) {
    %c0_i32 = arith.constant 0 : i32
    %c0_i32_0 = arith.constant 0 : i32
    return %arg0, %c0_i32 : i32, i32
  }
}

</mosaic_0001>

<llo_original>
// kernel: tpu_custom_call.1
$region0: #{tpu_custom_call.1}
  #allocation0 [shape = 'u32[]', space=smem, size = 0x4, offset = 0x4, fixed_abs, tag = 'smem constant byte address 0x4 - core index']
  #allocation1 [shape = 'u32[72,128]{1,0:T(1,128)}', space=vmem, size = 0x9000, scoped, tag = 'internal scratch']
  #allocation2 [shape = 'f32[8,32]{1,0:T(8,128)}', space=vmem, size = 0x1000, scoped, tag = 'scratch operand']
  %s0 = inlined_call_operand.vmem [shape: f32[16,32], index: 0, kind: input, shape index: {}]
  %s1 = inlined_call_operand.vmem [shape: bf16[32,96], index: 1, kind: input, shape index: {}]
  %s2 = inlined_call_operand.vmem [shape: f32[1,96], index: 2, kind: input, shape index: {}]
  %s3 = inlined_call_operand.vmem [shape: bf16[32,32], index: 3, kind: input, shape index: {}]
  %s4 = inlined_call_operand.vmem [shape: f32[1,32], index: 4, kind: input, shape index: {}]
  %s5 = inlined_call_operand.hbm [shape: bf16[32,64], index: 5, kind: input, shape index: {}]
  %s6 = inlined_call_operand.vmem [shape: f32[1,64], index: 6, kind: input, shape index: {}]
  %s7 = inlined_call_operand.vmem [shape: bf16[64,32], index: 7, kind: input, shape index: {}]
  %s8 = inlined_call_operand.vmem [shape: f32[1,32], index: 8, kind: input, shape index: {}]
  %s9 = inlined_call_operand.vmem [shape: f32[1,32], index: 9, kind: input, shape index: {}]
  %s10 = inlined_call_operand.vmem [shape: f32[1,32], index: 10, kind: input, shape index: {}]
  %s11 = inlined_call_operand.vmem [shape: f32[1,32], index: 11, kind: input, shape index: {}]
  %s12 = inlined_call_operand.vmem [shape: f32[1,32], index: 12, kind: input, shape index: {}]
  %s13 = inlined_call_operand.hbm [shape: f32[16,32], index: 13, kind: output, shape index: {}]
  %s14 = sld [smem:[#allocation0]]
  $region89: #{tpu_custom_call.1} parent=0
    _
  %s16 = ssub.s32 1, %s14
  %s17 = scalar_select 0, %s16, %s14
  $region1: #{tpu_custom_call.1} parent=0
    #allocation3 [shape = 'u8[8192]{0}', space=vmem, size = 0x2000, scoped, tag = 'input window, operand 5, single buffered']
    #allocation4 [shape = 's32[2]{0}', space=sflag, size = 0x8, scoped, tag = 'scoped memory for tpu_custom_call.1']
    #allocation5 [shape = 's32[2]{0}', space=sflag, size = 0x8, scoped, tag = 'scoped memory for tpu_custom_call.1']
    #allocation6 [shape = 'u8[8192]{0}', space=vmem, size = 0x2000, scoped, tag = 'output window, operand 0']
    %18 = vsyncpa [#allocation4], 0
    %19 = vsyncpa [#allocation5], 0
    %s20 = scalar_lea.sflag [#allocation5], 1
    %21 = vsyncpa %s20, 0
    loop: start=0, step=1, limit=4
    $region2: #{tpu_custom_call.1} parent=1 // loop_pre_header
      _
    $region3: #{tpu_custom_call.1} parent=1 // loop_header
      %s23 = sphi 0, %s27
      %p24 = scmp.ge.s32.totalorder %s23, 4
      %s33 = sphi 0, %s35
      %s36 = sphi 0, %s33
      %s37 = sphi 0, %s36
      %s53 = sphi 0, %s37
      %s57 = sphi 0, %s57
      %s59 = sphi 0, %s57
      %s60 = sphi 0, %s59
      %s74 = sphi 0, %s60
      %s78 = sphi 0, %s78
      %s80 = sphi 0, %s78
      %s81 = sphi 0, %s80
      %s95 = sphi 0, %s81
      %s99 = sphi 0, %s99
      %s101 = sphi 0, %s99
      %s102 = sphi 0, %s101
      %s116 = sphi 0, %s102
      %s120 = sphi 0, %s120
      %s122 = sphi 0, %s120
      %s123 = sphi 0, %s122
      %s137 = sphi 0, %s123
      %s141 = sphi 0, %s141
      %s143 = sphi 0, %s141
      %s144 = sphi 0, %s143
      %s158 = sphi 0, %s144
      %s162 = sphi 0, %s162
      %s164 = sphi 0, %s162
      %s165 = sphi 0, %s164
      %s179 = sphi 0, %s165
      %s183 = sphi 0, %s183
      %s185 = sphi 0, %s183
      %s186 = sphi 0, %s185
      %s200 = sphi 0, %s186
      %s204 = sphi 0, %s204
      %s206 = sphi 0, %s204
      %s207 = sphi 0, %s206
      %s221 = sphi 0, %s207
      %s225 = sphi 0, %s225
      %s227 = sphi 0, %s225
      %s228 = sphi 0, %s227
      %s242 = sphi 0, %s228
      %s246 = sphi 0, %s246
      %s248 = sphi 0, %s246
      %s249 = sphi 0, %s248
      %s263 = sphi 0, %s249
      %s267 = sphi 0, %s267
      %s269 = sphi 0, %s267
      %s270 = sphi 0, %s269
      %s284 = sphi 0, %s270
      %s288 = sphi 0, %s288
      %s290 = sphi 0, %s288
      %s291 = sphi 0, %s290
      %s305 = sphi 0, %s291
      %s311 = sphi 0, %s313
      %s314 = sphi 0, %s311
      %s315 = sphi 0, %s314
      %s331 = sphi 0, %s315
    $region4: #{tpu_custom_call.1} parent=1 // loop_header_branch
      %26 = sbr.rel (%p24) target = $region8
    $region5: #{tpu_custom_call.1} parent=1 // loop_body
      %s28 = ssub.s32 %s23, 1
      %s29 = ssub.s32 %s23, 2
      %s30 = sadd.s32 %s23, 1
      %s31 = ssub.s32 %s23, %s30
      %p32 = scmp.eq.s32.totalorder %s31, 0
      %s34 = sadd.s32 %s33, 1
      %s35 = scalar_select %p32, %s33, %s34
      %p38 = pneg %p32
      %p39 = scmp.eq.s32.totalorder %s23, 1
      %p40 = por %p38, %p39
      %p41 = scmp.ne.s32.totalorder %s33, %s36
      %p42 = scmp.eq.s32.totalorder %s23, 0
      %p43 = por %p41, %p42
      %p44 = scmp.ne.s32.totalorder %s33, %s36
      %p45 = scmp.eq.s32.totalorder %s28, 1
      %p46 = por %p44, %p45
      %p47 = scmp.ne.s32.totalorder %s36, %s37
      %p48 = scmp.eq.s32.totalorder %s28, 0
      %p49 = por %p47, %p48
      %p50 = scmp.ne.s32.totalorder %s36, %s37
      %p51 = scmp.eq.s32.totalorder %s29, 1
      %p52 = por %p50, %p51
      %p54 = scmp.ne.s32.totalorder %s37, %s53
      %p55 = scmp.eq.s32.totalorder %s29, 0
      %p56 = por %p54, %p55
      %s58 = sadd.s32 %s57, 1
      %p61 = scmp.eq.s32.totalorder %s23, 1
      %p62 = scmp.ne.s32.totalorder %s57, %s59
      %p63 = scmp.eq.s32.totalorder %s23, 0
      %p64 = por %p62, %p63
      %p65 = scmp.ne.s32.totalorder %s57, %s59
      %p66 = scmp.eq.s32.totalorder %s28, 1
      %p67 = por %p65, %p66
      %p68 = scmp.ne.s32.totalorder %s59, %s60
      %p69 = scmp.eq.s32.totalorder %s28, 0
      %p70 = por %p68, %p69
      %p71 = scmp.ne.s32.totalorder %s59, %s60
      %p72 = scmp.eq.s32.totalorder %s29, 1
      %p73 = por %p71, %p72
      %p75 = scmp.ne.s32.totalorder %s60, %s74
      %p76 = scmp.eq.s32.totalorder %s29, 0
      %p77 = por %p75, %p76
      %s79 = sadd.s32 %s78, 1
      %p82 = scmp.eq.s32.totalorder %s23, 1
      %p83 = scmp.ne.s32.totalorder %s78, %s80
      %p84 = scmp.eq.s32.totalorder %s23, 0
      %p85 = por %p83, %p84
      %p86 = scmp.ne.s32.totalorder %s78, %s80
      %p87 = scmp.eq.s32.totalorder %s28, 1
      %p88 = por %p86, %p87
      %p89 = scmp.ne.s32.totalorder %s80, %s81
      %p90 = scmp.eq.s32.totalorder %s28, 0
      %p91 = por %p89, %p90
      %p92 = scmp.ne.s32.totalorder %s80, %s81
      %p93 = scmp.eq.s32.totalorder %s29, 1
      %p94 = por %p92, %p93
      %p96 = scmp.ne.s32.totalorder %s81, %s95
      %p97 = scmp.eq.s32.totalorder %s29, 0
      %p98 = por %p96, %p97
      %s100 = sadd.s32 %s99, 1
      %p103 = scmp.eq.s32.totalorder %s23, 1
      %p104 = scmp.ne.s32.totalorder %s99, %s101
      %p105 = scmp.eq.s32.totalorder %s23, 0
      %p106 = por %p104, %p105
      %p107 = scmp.ne.s32.totalorder %s99, %s101
      %p108 = scmp.eq.s32.totalorder %s28, 1
      %p109 = por %p107, %p108
      %p110 = scmp.ne.s32.totalorder %s101, %s102
      %p111 = scmp.eq.s32.totalorder %s28, 0
      %p112 = por %p110, %p111
      %p113 = scmp.ne.s32.totalorder %s101, %s102
      %p114 = scmp.eq.s32.totalorder %s29, 1
      %p115 = por %p113, %p114
      %p117 = scmp.ne.s32.totalorder %s102, %s116
      %p118 = scmp.eq.s32.totalorder %s29, 0
      %p119 = por %p117, %p118
      %s121 = sadd.s32 %s120, 1
      %p124 = scmp.eq.s32.totalorder %s23, 1
      %p125 = scmp.ne.s32.totalorder %s120, %s122
      %p126 = scmp.eq.s32.totalorder %s23, 0
      %p127 = por %p125, %p126
      %p128 = scmp.ne.s32.totalorder %s120, %s122
      %p129 = scmp.eq.s32.totalorder %s28, 1
      %p130 = por %p128, %p129
      %p131 = scmp.ne.s32.totalorder %s122, %s123
      %p132 = scmp.eq.s32.totalorder %s28, 0
      %p133 = por %p131, %p132
      %p134 = scmp.ne.s32.totalorder %s122, %s123
      %p135 = scmp.eq.s32.totalorder %s29, 1
      %p136 = por %p134, %p135
      %p138 = scmp.ne.s32.totalorder %s123, %s137
      %p139 = scmp.eq.s32.totalorder %s29, 0
      %p140 = por %p138, %p139
      %s142 = sadd.s32 %s141, 1
      %p145 = scmp.eq.s32.totalorder %s23, 1
      %p146 = scmp.ne.s32.totalorder %s141, %s143
      %p147 = scmp.eq.s32.totalorder %s23, 0
      %p148 = por %p146, %p147
      %p149 = scmp.ne.s32.totalorder %s141, %s143
      %p150 = scmp.eq.s32.totalorder %s28, 1
      %p151 = por %p149, %p150
      %p152 = scmp.ne.s32.totalorder %s143, %s144
      %p153 = scmp.eq.s32.totalorder %s28, 0
      %p154 = por %p152, %p153
      %p155 = scmp.ne.s32.totalorder %s143, %s144
      %p156 = scmp.eq.s32.totalorder %s29, 1
      %p157 = por %p155, %p156
      %p159 = scmp.ne.s32.totalorder %s144, %s158
      %p160 = scmp.eq.s32.totalorder %s29, 0
      %p161 = por %p159, %p160
      %s163 = sadd.s32 %s162, 1
      %p166 = scmp.eq.s32.totalorder %s23, 1
      %p167 = scmp.ne.s32.totalorder %s162, %s164
      %p168 = scmp.eq.s32.totalorder %s23, 0
      %p169 = por %p167, %p168
      %p170 = scmp.ne.s32.totalorder %s162, %s164
      %p171 = scmp.eq.s32.totalorder %s28, 1
      %p172 = por %p170, %p171
      %p173 = scmp.ne.s32.totalorder %s164, %s165
      %p174 = scmp.eq.s32.totalorder %s28, 0
      %p175 = por %p173, %p174
      %p176 = scmp.ne.s32.totalorder %s164, %s165
      %p177 = scmp.eq.s32.totalorder %s29, 1
      %p178 = por %p176, %p177
      %p180 = scmp.ne.s32.totalorder %s165, %s179
      %p181 = scmp.eq.s32.totalorder %s29, 0
      %p182 = por %p180, %p181
      %s184 = sadd.s32 %s183, 1
      %p187 = scmp.eq.s32.totalorder %s23, 1
      %p188 = scmp.ne.s32.totalorder %s183, %s185
      %p189 = scmp.eq.s32.totalorder %s23, 0
      %p190 = por %p188, %p189
      %p191 = scmp.ne.s32.totalorder %s183, %s185
      %p192 = scmp.eq.s32.totalorder %s28, 1
      %p193 = por %p191, %p192
      %p194 = scmp.ne.s32.totalorder %s185, %s186
      %p195 = scmp.eq.s32.totalorder %s28, 0
      %p196 = por %p194, %p195
      %p197 = scmp.ne.s32.totalorder %s185, %s186
      %p198 = scmp.eq.s32.totalorder %s29, 1
      %p199 = por %p197, %p198
      %p201 = scmp.ne.s32.totalorder %s186, %s200
      %p202 = scmp.eq.s32.totalorder %s29, 0
      %p203 = por %p201, %p202
      %s205 = sadd.s32 %s204, 1
      %p208 = scmp.eq.s32.totalorder %s23, 1
      %p209 = scmp.ne.s32.totalorder %s204, %s206
      %p210 = scmp.eq.s32.totalorder %s23, 0
      %p211 = por %p209, %p210
      %p212 = scmp.ne.s32.totalorder %s204, %s206
      %p213 = scmp.eq.s32.totalorder %s28, 1
      %p214 = por %p212, %p213
      %p215 = scmp.ne.s32.totalorder %s206, %s207
      %p216 = scmp.eq.s32.totalorder %s28, 0
      %p217 = por %p215, %p216
      %p218 = scmp.ne.s32.totalorder %s206, %s207
      %p219 = scmp.eq.s32.totalorder %s29, 1
      %p220 = por %p218, %p219
      %p222 = scmp.ne.s32.totalorder %s207, %s221
      %p223 = scmp.eq.s32.totalorder %s29, 0
      %p224 = por %p222, %p223
      %s226 = sadd.s32 %s225, 1
      %p229 = scmp.eq.s32.totalorder %s23, 1
      %p230 = scmp.ne.s32.totalorder %s225, %s227
      %p231 = scmp.eq.s32.totalorder %s23, 0
      %p232 = por %p230, %p231
      %p233 = scmp.ne.s32.totalorder %s225, %s227
      %p234 = scmp.eq.s32.totalorder %s28, 1
      %p235 = por %p233, %p234
      %p236 = scmp.ne.s32.totalorder %s227, %s228
      %p237 = scmp.eq.s32.totalorder %s28, 0
      %p238 = por %p236, %p237
      %p239 = scmp.ne.s32.totalorder %s227, %s228
      %p240 = scmp.eq.s32.totalorder %s29, 1
      %p241 = por %p239, %p240
      %p243 = scmp.ne.s32.totalorder %s228, %s242
      %p244 = scmp.eq.s32.totalorder %s29, 0
      %p245 = por %p243, %p244
      %s247 = sadd.s32 %s246, 1
      %p250 = scmp.eq.s32.totalorder %s23, 1
      %p251 = scmp.ne.s32.totalorder %s246, %s248
      %p252 = scmp.eq.s32.totalorder %s23, 0
      %p253 = por %p251, %p252
      %p254 = scmp.ne.s32.totalorder %s246, %s248
      %p255 = scmp.eq.s32.totalorder %s28, 1
      %p256 = por %p254, %p255
      %p257 = scmp.ne.s32.totalorder %s248, %s249
      %p258 = scmp.eq.s32.totalorder %s28, 0
      %p259 = por %p257, %p258
      %p260 = scmp.ne.s32.totalorder %s248, %s249
      %p261 = scmp.eq.s32.totalorder %s29, 1
      %p262 = por %p260, %p261
      %p264 = scmp.ne.s32.totalorder %s249, %s263
      %p265 = scmp.eq.s32.totalorder %s29, 0
      %p266 = por %p264, %p265
      %s268 = sadd.s32 %s267, 1
      %p271 = scmp.eq.s32.totalorder %s23, 1
      %p272 = scmp.ne.s32.totalorder %s267, %s269
      %p273 = scmp.eq.s32.totalorder %s23, 0
      %p274 = por %p272, %p273
      %p275 = scmp.ne.s32.totalorder %s267, %s269
      %p276 = scmp.eq.s32.totalorder %s28, 1
      %p277 = por %p275, %p276
      %p278 = scmp.ne.s32.totalorder %s269, %s270
      %p279 = scmp.eq.s32.totalorder %s28, 0
      %p280 = por %p278, %p279
      %p281 = scmp.ne.s32.totalorder %s269, %s270
      %p282 = scmp.eq.s32.totalorder %s29, 1
      %p283 = por %p281, %p282
      %p285 = scmp.ne.s32.totalorder %s270, %s284
      %p286 = scmp.eq.s32.totalorder %s29, 0
      %p287 = por %p285, %p286
      %s289 = sadd.s32 %s288, 1
      %p292 = scmp.eq.s32.totalorder %s23, 1
      %p293 = scmp.ne.s32.totalorder %s288, %s290
      %p294 = scmp.eq.s32.totalorder %s23, 0
      %p295 = por %p293, %p294
      %p296 = scmp.ne.s32.totalorder %s288, %s290
      %p297 = scmp.eq.s32.totalorder %s28, 1
      %p298 = por %p296, %p297
      %p299 = scmp.ne.s32.totalorder %s290, %s291
      %p300 = scmp.eq.s32.totalorder %s28, 0
      %p301 = por %p299, %p300
      %p302 = scmp.ne.s32.totalorder %s290, %s291
      %p303 = scmp.eq.s32.totalorder %s29, 1
      %p304 = por %p302, %p303
      %p306 = scmp.ne.s32.totalorder %s291, %s305
      %p307 = scmp.eq.s32.totalorder %s29, 0
      %p308 = por %p306, %p307
      %s309 = ssub.s32 %s23, %s30
      %p310 = scmp.eq.s32.totalorder %s309, 0
      %s312 = sadd.s32 %s311, 1
      %s313 = scalar_select %p310, %s311, %s312
      %p316 = pneg %p310
      %p317 = scmp.eq.s32.totalorder %s23, 1
      %p318 = por %p316, %p317
      %p319 = scmp.ne.s32.totalorder %s311, %s314
      %p320 = scmp.eq.s32.totalorder %s23, 0
      %p321 = por %p319, %p320
      %p322 = scmp.ne.s32.totalorder %s311, %s314
      %p323 = scmp.eq.s32.totalorder %s28, 1
      %p324 = por %p322, %p323
      %p325 = scmp.ne.s32.totalorder %s314, %s315
      %p326 = scmp.eq.s32.totalorder %s28, 0
      %p327 = por %p325, %p326
      %p328 = scmp.ne.s32.totalorder %s314, %s315
      %p329 = scmp.eq.s32.totalorder %s29, 1
      %p330 = por %p328, %p329
      %p332 = scmp.ne.s32.totalorder %s315, %s331
      %p333 = scmp.eq.s32.totalorder %s29, 0
      %p334 = por %p332, %p333
      %p335 = scmp.le.s32.totalorder 1, %s23
      %p336 = scmp.lt.s32.totalorder %s23, 3
      %p337 = pnand %p335, %p336
      %p338 = pneg %p337
      // Predicated region
      $region9: #{tpu_custom_call.1} parent=5 // pred_check
        _
      $region10: #{tpu_custom_call.1} parent=5 // pred_check_branch
        %340 = sbr.rel (%p337) target = $region12
      $region11: #{tpu_custom_call.1} parent=5 // pred_region
        %s341 = ssub.s32 %s23, 1
        // Predicated region
        $region13: #{tpu_custom_call.1} parent=11 // pred_check
          %p342 = pneg %p70
        $region14: #{tpu_custom_call.1} parent=11 // pred_check_branch
          %344 = sbr.rel (%p342) target = $region16
        $region15: #{tpu_custom_call.1} parent=11 // pred_region
          _
        $region16: #{tpu_custom_call.1} parent=11 // pred_fallthru
          _
        // Predicated region
        $region17: #{tpu_custom_call.1} parent=11 // pred_check
          %p345 = pneg %p91
        $region18: #{tpu_custom_call.1} parent=11 // pred_check_branch
          %347 = sbr.rel (%p345) target = $region20
        $region19: #{tpu_custom_call.1} parent=11 // pred_region
          _
        $region20: #{tpu_custom_call.1} parent=11 // pred_fallthru
          _
        // Predicated region
        $region21: #{tpu_custom_call.1} parent=11 // pred_check
          %p348 = pneg %p112
        $region22: #{tpu_custom_call.1} parent=11 // pred_check_branch
          %350 = sbr.rel (%p348) target = $region24
        $region23: #{tpu_custom_call.1} parent=11 // pred_region
          _
        $region24: #{tpu_custom_call.1} parent=11 // pred_fallthru
          _
        // Predicated region
        $region25: #{tpu_custom_call.1} parent=11 // pred_check
          %p351 = pneg %p133
        $region26: #{tpu_custom_call.1} parent=11 // pred_check_branch
          %353 = sbr.rel (%p351) target = $region28
        $region27: #{tpu_custom_call.1} parent=11 // pred_region
          _
        $region28: #{tpu_custom_call.1} parent=11 // pred_fallthru
          _
        // Predicated region
        $region29: #{tpu_custom_call.1} parent=11 // pred_check
          %p354 = pneg %p154
        $region30: #{tpu_custom_call.1} parent=11 // pred_check_branch
          %356 = sbr.rel (%p354) target = $region32
        $region31: #{tpu_custom_call.1} parent=11 // pred_region
          %358 = vsyncadd [#allocation4], 0
          %s359 = sshll.u32 %s5, 4
          %s360 = int_to_ptr.hbm [resolvable:$true] %s359
          %s361 = sshll.u32 [#allocation3], 4
          %s362 = int_to_ptr.vmem [resolvable:$true] %s361
          %367 = dma.hbm_to_vmem [thread:$0]  %s360, 256, %s362, [#allocation4], 64, 64, 4
        $region32: #{tpu_custom_call.1} parent=11 // pred_fallthru
          _
        // Predicated region
        $region33: #{tpu_custom_call.1} parent=11 // pred_check
          %p368 = pneg %p175
        $region34: #{tpu_custom_call.1} parent=11 // pred_check_branch
          %370 = sbr.rel (%p368) target = $region36
        $region35: #{tpu_custom_call.1} parent=11 // pred_region
          _
        $region36: #{tpu_custom_call.1} parent=11 // pred_fallthru
          _
        // Predicated region
        $region37: #{tpu_custom_call.1} parent=11 // pred_check
          %p371 = pneg %p196
        $region38: #{tpu_custom_call.1} parent=11 // pred_check_branch
          %373 = sbr.rel (%p371) target = $region40
        $region39: #{tpu_custom_call.1} parent=11 // pred_region
          _
        $region40: #{tpu_custom_call.1} parent=11 // pred_fallthru
          _
        // Predicated region
        $region41: #{tpu_custom_call.1} parent=11 // pred_check
          %p374 = pneg %p217
        $region42: #{tpu_custom_call.1} parent=11 // pred_check_branch
          %376 = sbr.rel (%p374) target = $region44
        $region43: #{tpu_custom_call.1} parent=11 // pred_region
          _
        $region44: #{tpu_custom_call.1} parent=11 // pred_fallthru
          _
        // Predicated region
        $region45: #{tpu_custom_call.1} parent=11 // pred_check
          %p377 = pneg %p238
        $region46: #{tpu_custom_call.1} parent=11 // pred_check_branch
          %379 = sbr.rel (%p377) target = $region48
        $region47: #{tpu_custom_call.1} parent=11 // pred_region
          _
        $region48: #{tpu_custom_call.1} parent=11 // pred_fallthru
          _
        // Predicated region
        $region49: #{tpu_custom_call.1} parent=11 // pred_check
          %p380 = pneg %p259
        $region50: #{tpu_custom_call.1} parent=11 // pred_check_branch
          %382 = sbr.rel (%p380) target = $region52
        $region51: #{tpu_custom_call.1} parent=11 // pred_region
          _
        $region52: #{tpu_custom_call.1} parent=11 // pred_fallthru
          _
        // Predicated region
        $region53: #{tpu_custom_call.1} parent=11 // pred_check
          %p383 = pneg %p280
        $region54: #{tpu_custom_call.1} parent=11 // pred_check_branch
          %385 = sbr.rel (%p383) target = $region56
        $region55: #{tpu_custom_call.1} parent=11 // pred_region
          _
        $region56: #{tpu_custom_call.1} parent=11 // pred_fallthru
          _
        // Predicated region
        $region57: #{tpu_custom_call.1} parent=11 // pred_check
          %p386 = pneg %p301
        $region58: #{tpu_custom_call.1} parent=11 // pred_check_branch
          %388 = sbr.rel (%p386) target = $region60
        $region59: #{tpu_custom_call.1} parent=11 // pred_region
          _
        $region60: #{tpu_custom_call.1} parent=11 // pred_fallthru
          _
      $region12: #{tpu_custom_call.1} parent=5 // pred_fallthru
        _
      %p389 = scmp.lt.s32.totalorder %s23, 2
      // Predicated region
      $region61: #{tpu_custom_call.1} parent=5 // pred_check
        %p390 = pneg %p389
      $region62: #{tpu_custom_call.1} parent=5 // pred_check_branch
        %392 = sbr.rel (%p390) target = $region64
      $region63: #{tpu_custom_call.1} parent=5 // pred_region
        // Predicated region
        $region65: #{tpu_custom_call.1} parent=63 // pred_check
          %p393 = pneg %p43
        $region66: #{tpu_custom_call.1} parent=63 // pred_check_branch
          %395 = sbr.rel (%p393) target = $region68
        $region67: #{tpu_custom_call.1} parent=63 // pred_region
          %p396 = scmp.lt.s32.totalorder %s23, 1
          %s397 = scalar_select %p396, %s23, 1
          %s398 = smul.addr %s397, 8
          %s399 = scalar_lea.vmem %s0, %s398
        $region68: #{tpu_custom_call.1} parent=63 // pred_fallthru
          _
      $region64: #{tpu_custom_call.1} parent=5 // pred_fallthru
        _
      %p400 = scmp.le.s32.totalorder 1, %s23
      %p401 = scmp.lt.s32.totalorder %s23, 3
      %p402 = pnand %p400, %p401
      %p403 = pneg %p402
      // Predicated region
      $region69: #{tpu_custom_call.1} parent=5 // pred_check
        _
      $region70: #{tpu_custom_call.1} parent=5 // pred_check_branch
        %405 = sbr.rel (%p402) target = $region72
      $region71: #{tpu_custom_call.1} parent=5 // pred_region
        %s406 = ssub.s32 %s23, 1
        // Predicated region
        $region73: #{tpu_custom_call.1} parent=71 // pred_check
          %p407 = pneg %p154
        $region74: #{tpu_custom_call.1} parent=71 // pred_check_branch
          %409 = sbr.rel (%p407) target = $region76
        $region75: #{tpu_custom_call.1} parent=71 // pred_region
          %411 = dma.done [#allocation4], 256
        $region76: #{tpu_custom_call.1} parent=71 // pred_fallthru
          _
        %p412 = scmp.lt.s32.totalorder %s28, 1
        %s413 = scalar_select %p412, %s28, 1
        %s414 = smul.addr %s413, 8
        %s415 = scalar_lea.vmem %s0, %s414
        %p416 = pneg %p49
        %p417 = pneg %p46
        %p418 = pneg %p70
        %p419 = pneg %p67
        %p420 = pneg %p91
        %p421 = pneg %p88
        %p422 = pneg %p112
        %p423 = pneg %p109
        %p424 = pneg %p133
        %p425 = pneg %p130
        %p426 = pneg %p154
        %p427 = pneg %p151
        %p428 = pneg %p175
        %p429 = pneg %p172
        %p430 = pneg %p196
        %p431 = pneg %p193
        %p432 = pneg %p217
        %p433 = pneg %p214
        %p434 = pneg %p238
        %p435 = pneg %p235
        %p436 = pneg %p259
        %p437 = pneg %p256
        %p438 = pneg %p280
        %p439 = pneg %p277
        %p440 = pneg %p301
        %p441 = pneg %p298
        %p442 = pneg %p327
        %p443 = pneg %p324
        %s444 = sand.u32 %s314, 1
        %s445 = scalar_lea.sflag [#allocation5], %s444
        %s446 = sand.u32 %s314, 1
        %s447 = smul.addr %s446, 8
        %s448 = scalar_lea.vmem [#allocation6], %s447
        %p449 = scmp.lt.s32.totalorder %s28, 1
        %s450 = scalar_select %p449, %s28, 1
        %s451 = smul.addr %s450, 8
        %s452 = scalar_lea.vmem %s0, %s451
        %v454 = vld [vmem:[%s452] sm:$0xff]
        %v455 = vpack.c.bf16 %v454, %v454
        %v456 = vld [vmem:[%s1] sm:$0xf]
        %v457 = vld [vmem:[%s1 + $0x4] sm:$0xf]
        %v458 = vld [vmem:[%s1 + $0x8] sm:$0xf]
        %v459 = vld [vmem:[%s1 + $0xc] sm:$0xf]
        %v460 = vld [vmem:[%s2] sm:$0x1]
        %v462 = vperm.slane %v460, 0
        %v468 = vunpack.c.l.b16 %v456
        %v469 = vunpack.c.l.b16 %v457
        %v470 = vunpack.c.l.b16 %v458
        %v471 = vunpack.c.l.b16 %v459
        %v472 = vpack.c.b16 %v469, %v468
        %v473 = vpack.c.b16 %v471, %v470
        %vm476 = vcmask 261120
        %v478 = vsel %vm476, %v455, 0
        %480 = vmatpush.bf16.msra.mxu0 0
        %481 = vmatpush.bf16.msra.mxu0 0
        %482 = vmatpush.bf16.msra.mxu0 0
        %483 = vmatpush.bf16.msra.mxu0 0
        %484 = vmatpush.bf16.msra.mxu0 0
        %485 = vmatpush.bf16.msra.mxu0 0
        %486 = vmatpush.bf16.msra.mxu0 %v473
        %487 = vmatpush.bf16.msra.mxu0 %v472
        %488 = vmatmul.bf16.gmra.mxu0 %v478
        %v489 = vpop.f32.mrf.mxu0
        %v490 = vadd.f32 %v462, %v489
        %v491 = vpop.f32.mrf.mxu0
        %492 = vdwg.mxu0
        %v493 = vpack.c.bf16 %v490, %v490
        %v495 = vunpack.c.l.b16 %v493
        %v496 = vpack.c.b16 %v495, %v495
        %497 = vrot.lane.b32.xlu0 %v496, 96
        %v498 = vpop.permute.xlu0 %497
        %vm499 = vcmask 64512
        %v501 = vsel %vm499, %v493, 0
        %v504 = vsel %vm499, %v498, 0
        %506 = vmatpush.bf16.xpose.msra.mxu0 0
        %507 = vmatpush.bf16.xpose.msra.mxu0 0
        %508 = vmatpush.bf16.xpose.msra.mxu0 0
        %509 = vmatpush.bf16.xpose.msra.mxu0 0
        %510 = vmatpush.bf16.xpose.msra.mxu0 0
        %511 = vmatpush.bf16.xpose.msra.mxu0 0
        %512 = vmatpush.bf16.xpose.msra.mxu0 0
        %513 = vmatpush.bf16.xpose.msra.mxu0 %v504
        %514 = vmatmul.bf16.gmra.mxu0 %v501
        %v515 = vpop.f32.mrf.mxu0
        %v516 = vadd.f32 0.0, %v515
        %v517 = vpop.f32.mrf.mxu0
        %518 = vdwg.mxu0
        %v519 = vsel %vm499, %v516, -inf
        %520 = vmax.xlane.f32.xlu0 %v519
        %v521 = vpop.xlane.xlu0 %520
        %v522 = vsub.f32 %v516, %v521
        %v523 = vmul.f32 %v522, 1.442695
        %v524 = vpow.pop %v523
        %v525 = vsel %vm499, %v524, 0.0
        %526 = vadd.xlane.f32.xlu0 %v525
        %v527 = vpop.xlane.xlu0 %526
        %v528 = vrcp.pop %v527
        %v529 = vmul.f32 %v524, %v528
        %v530 = vpack.c.bf16 %v529, %v529
        %531 = vrot.lane.b32.xlu0 %v496, 64
        %v532 = vpop.permute.xlu0 %531
        %v534 = vsel %vm499, %v530, 0
        %vm536 = vcmask 1043456
        %v538 = vsel %vm536, %v532, 0
        %540 = vmatpush.bf16.msra.mxu0 0
        %541 = vmatpush.bf16.msra.mxu0 0
        %542 = vmatpush.bf16.msra.mxu0 0
        %543 = vmatpush.bf16.msra.mxu0 0
        %544 = vmatpush.bf16.msra.mxu0 0
        %545 = vmatpush.bf16.msra.mxu0 0
        %546 = vmatpush.bf16.msra.mxu0 0
        %547 = vmatpush.bf16.msra.mxu0 %v538
        %548 = vmatmul.bf16.gmra.mxu0 %v534
        %v549 = vpop.f32.mrf.mxu0
        %v550 = vadd.f32 0.0, %v549
        %v551 = vpop.f32.mrf.mxu0
        %552 = vdwg.mxu0
        %553 = vst.msk [vmem:[#allocation2] sm:$0xff] %vm499, %v550
        %554 = vrot.lane.b32.xlu0 %v496, 120
        %v555 = vpop.permute.xlu0 %554
        %556 = vrot.lane.b32.xlu0 %v496, 88
        %v557 = vpop.permute.xlu0 %556
        %v559 = vsel %vm499, %v555, 0
        %v562 = vsel %vm499, %v557, 0
        %564 = vmatpush.bf16.xpose.msra.mxu0 0
        %565 = vmatpush.bf16.xpose.msra.mxu0 0
        %566 = vmatpush.bf16.xpose.msra.mxu0 0
        %567 = vmatpush.bf16.xpose.msra.mxu0 0
        %568 = vmatpush.bf16.xpose.msra.mxu0 0
        %569 = vmatpush.bf16.xpose.msra.mxu0 0
        %570 = vmatpush.bf16.xpose.msra.mxu0 0
        %571 = vmatpush.bf16.xpose.msra.mxu0 %v562
        %572 = vmatmul.bf16.gmra.mxu0 %v559
        %v573 = vpop.f32.mrf.mxu0
        %v574 = vadd.f32 0.0, %v573
        %v575 = vpop.f32.mrf.mxu0
        %576 = vdwg.mxu0
        %v577 = vsel %vm499, %v574, -inf
        %578 = vmax.xlane.f32.xlu0 %v577
        %v579 = vpop.xlane.xlu0 %578
        %v580 = vsub.f32 %v574, %v579
        %v581 = vmul.f32 %v580, 1.442695
        %v582 = vpow.pop %v581
        %v583 = vsel %vm499, %v582, 0.0
        %584 = vadd.xlane.f32.xlu0 %v583
        %v585 = vpop.xlane.xlu0 %584
        %v586 = vrcp.pop %v585
        %v587 = vmul.f32 %v582, %v586
        %v588 = vpack.c.bf16 %v587, %v587
        %589 = vrot.lane.b32.xlu0 %v496, 56
        %v590 = vpop.permute.xlu0 %589
        %v592 = vsel %vm499, %v588, 0
        %v595 = vsel %vm536, %v590, 0
        %597 = vmatpush.bf16.msra.mxu0 0
        %598 = vmatpush.bf16.msra.mxu0 0
        %599 = vmatpush.bf16.msra.mxu0 0
        %600 = vmatpush.bf16.msra.mxu0 0
        %601 = vmatpush.bf16.msra.mxu0 0
        %602 = vmatpush.bf16.msra.mxu0 0
        %603 = vmatpush.bf16.msra.mxu0 0
        %604 = vmatpush.bf16.msra.mxu0 %v595
        %605 = vmatmul.bf16.gmra.mxu0 %v592
        %v606 = vpop.f32.mrf.mxu0
        %v607 = vadd.f32 0.0, %v606
        %v608 = vpop.f32.mrf.mxu0
        %609 = vdwg.mxu0
        %611 = vrot.lane.b32.xlu0 %v607, 8
        %v612 = vpop.permute.xlu0 %611
        %vm614 = vcmask 130112
        %615 = vst.msk [vmem:[#allocation2] sm:$0xff] %vm614, %v612
        %616 = vrot.lane.b32.xlu0 %v496, 112
        %v617 = vpop.permute.xlu0 %616
        %618 = vrot.lane.b32.xlu0 %v496, 80
        %v619 = vpop.permute.xlu0 %618
        %v621 = vsel %vm499, %v617, 0
        %v624 = vsel %vm499, %v619, 0
        %626 = vmatpush.bf16.xpose.msra.mxu0 0
        %627 = vmatpush.bf16.xpose.msra.mxu0 0
        %628 = vmatpush.bf16.xpose.msra.mxu0 0
        %629 = vmatpush.bf16.xpose.msra.mxu0 0
        %630 = vmatpush.bf16.xpose.msra.mxu0 0
        %631 = vmatpush.bf16.xpose.msra.mxu0 0
        %632 = vmatpush.bf16.xpose.msra.mxu0 0
        %633 = vmatpush.bf16.xpose.msra.mxu0 %v624
        %634 = vmatmul.bf16.gmra.mxu0 %v621
        %v635 = vpop.f32.mrf.mxu0
        %v636 = vadd.f32 0.0, %v635
        %v637 = vpop.f32.mrf.mxu0
        %638 = vdwg.mxu0
        %v639 = vsel %vm499, %v636, -inf
        %640 = vmax.xlane.f32.xlu0 %v639
        %v641 = vpop.xlane.xlu0 %640
        %v642 = vsub.f32 %v636, %v641
        %v643 = vmul.f32 %v642, 1.442695
        %v644 = vpow.pop %v643
        %v645 = vsel %vm499, %v644, 0.0
        %646 = vadd.xlane.f32.xlu0 %v645
        %v647 = vpop.xlane.xlu0 %646
        %v648 = vrcp.pop %v647
        %v649 = vmul.f32 %v644, %v648
        %v650 = vpack.c.bf16 %v649, %v649
        %651 = vrot.lane.b32.xlu0 %v496, 48
        %v652 = vpop.permute.xlu0 %651
        %v654 = vsel %vm499, %v650, 0
        %v657 = vsel %vm536, %v652, 0
        %659 = vmatpush.bf16.msra.mxu0 0
        %660 = vmatpush.bf16.msra.mxu0 0
        %661 = vmatpush.bf16.msra.mxu0 0
        %662 = vmatpush.bf16.msra.mxu0 0
        %663 = vmatpush.bf16.msra.mxu0 0
        %664 = vmatpush.bf16.msra.mxu0 0
        %665 = vmatpush.bf16.msra.mxu0 0
        %666 = vmatpush.bf16.msra.mxu0 %v657
        %667 = vmatmul.bf16.gmra.mxu0 %v654
        %v668 = vpop.f32.mrf.mxu0
        %v669 = vadd.f32 0.0, %v668
        %v670 = vpop.f32.mrf.mxu0
        %671 = vdwg.mxu0
        %673 = vrot.lane.b32.xlu0 %v669, 16
        %v674 = vpop.permute.xlu0 %673
        %vm676 = vcmask 195712
        %677 = vst.msk [vmem:[#allocation2] sm:$0xff] %vm676, %v674
        %678 = vrot.lane.b32.xlu0 %v496, 104
        %v679 = vpop.permute.xlu0 %678
        %680 = vrot.lane.b32.xlu0 %v496, 72
        %v681 = vpop.permute.xlu0 %680
        %v683 = vsel %vm499, %v679, 0
        %v686 = vsel %vm499, %v681, 0
        %688 = vmatpush.bf16.xpose.msra.mxu0 0
        %689 = vmatpush.bf16.xpose.msra.mxu0 0
        %690 = vmatpush.bf16.xpose.msra.mxu0 0
        %691 = vmatpush.bf16.xpose.msra.mxu0 0
        %692 = vmatpush.bf16.xpose.msra.mxu0 0
        %693 = vmatpush.bf16.xpose.msra.mxu0 0
        %694 = vmatpush.bf16.xpose.msra.mxu0 0
        %695 = vmatpush.bf16.xpose.msra.mxu0 %v686
        %696 = vmatmul.bf16.gmra.mxu0 %v683
        %v697 = vpop.f32.mrf.mxu0
        %v698 = vadd.f32 0.0, %v697
        %v699 = vpop.f32.mrf.mxu0
        %700 = vdwg.mxu0
        %v701 = vsel %vm499, %v698, -inf
        %702 = vmax.xlane.f32.xlu0 %v701
        %v703 = vpop.xlane.xlu0 %702
        %v704 = vsub.f32 %v698, %v703
        %v705 = vmul.f32 %v704, 1.442695
        %v706 = vpow.pop %v705
        %v707 = vsel %vm499, %v706, 0.0
        %708 = vadd.xlane.f32.xlu0 %v707
        %v709 = vpop.xlane.xlu0 %708
        %v710 = vrcp.pop %v709
        %v711 = vmul.f32 %v706, %v710
        %v712 = vpack.c.bf16 %v711, %v711
        %713 = vrot.lane.b32.xlu0 %v496, 40
        %v714 = vpop.permute.xlu0 %713
        %v716 = vsel %vm499, %v712, 0
        %v719 = vsel %vm536, %v714, 0
        %721 = vmatpush.bf16.msra.mxu0 0
        %722 = vmatpush.bf16.msra.mxu0 0
        %723 = vmatpush.bf16.msra.mxu0 0
        %724 = vmatpush.bf16.msra.mxu0 0
        %725 = vmatpush.bf16.msra.mxu0 0
        %726 = vmatpush.bf16.msra.mxu0 0
        %727 = vmatpush.bf16.msra.mxu0 0
        %728 = vmatpush.bf16.msra.mxu0 %v719
        %729 = vmatmul.bf16.gmra.mxu0 %v716
        %v730 = vpop.f32.mrf.mxu0
        %v731 = vadd.f32 0.0, %v730
        %v732 = vpop.f32.mrf.mxu0
        %733 = vdwg.mxu0
        %735 = vrot.lane.b32.xlu0 %v731, 24
        %v736 = vpop.permute.xlu0 %735
        %vm738 = vcmask 261312
        %739 = vst.msk [vmem:[#allocation2] sm:$0xff] %vm738, %v736
        %v740 = vld [vmem:[#allocation2] sm:$0xff]
        %v741 = vpack.c.bf16 %v740, %v740
        %v742 = vld [vmem:[%s3] sm:$0xf]
        %v743 = vld [vmem:[%s3 + $0x4] sm:$0xf]
        %v744 = vld [vmem:[%s3 + $0x8] sm:$0xf]
        %v745 = vld [vmem:[%s3 + $0xc] sm:$0xf]
        %v746 = vld [vmem:[%s4] sm:$0x1]
        %v748 = vperm.slane %v746, 0
        %v754 = vunpack.c.l.b16 %v742
        %v755 = vunpack.c.l.b16 %v743
        %v756 = vunpack.c.l.b16 %v744
        %v757 = vunpack.c.l.b16 %v745
        %v758 = vpack.c.b16 %v755, %v754
        %v759 = vpack.c.b16 %v757, %v756
        %v763 = vsel %vm476, %v741, 0
        %765 = vmatpush.bf16.msra.mxu0 0
        %766 = vmatpush.bf16.msra.mxu0 0
        %767 = vmatpush.bf16.msra.mxu0 0
        %768 = vmatpush.bf16.msra.mxu0 0
        %769 = vmatpush.bf16.msra.mxu0 0
        %770 = vmatpush.bf16.msra.mxu0 0
        %771 = vmatpush.bf16.msra.mxu0 %v759
        %772 = vmatpush.bf16.msra.mxu0 %v758
        %773 = vmatmul.bf16.gmra.mxu0 %v763
        %v774 = vpop.f32.mrf.mxu0
        %v775 = vadd.f32 %v748, %v774
        %v776 = vpop.f32.mrf.mxu0
        %777 = vdwg.mxu0
        %v778 = vadd.f32 %v454, %v775
        %v779 = vld [vmem:[%s9] sm:$0x1]
        %v780 = vld [vmem:[%s10] sm:$0x1]
        %v781 = vsel %vm476, %v778, 0.0
        %782 = vadd.xlane.f32.xlu0 %v781
        %v783 = vpop.xlane.xlu0 %782
        %v784 = vrcp.pop 32.0
        %v785 = vmul.f32 32.0, %v784
        %v786 = vsub.f32 1.0, %v785
        %v787 = vmul.f32 %v784, %v786
        %v788 = vadd.f32 %v784, %v787
        %vm789 = vweird.f32 %v784
        %v790 = vsel %vm789, %v784, %v788
        %v791 = vmul.f32 %v783, %v790
        %v792 = vsub.f32 %v778, %v791
        %v793 = vmul.f32 %v792, %v792
        %v794 = vsel %vm476, %v793, 0.0
        %795 = vadd.xlane.f32.xlu0 %v794
        %v796 = vpop.xlane.xlu0 %795
        %v797 = vmul.f32 %v796, %v790
        %v798 = vadd.f32 %v797, 1e-05
        %v799 = vrsqrt.pop %v798
        %v800 = vmul.f32 %v799, %v798
        %v801 = vmul.f32 %v800, %v799
        %v802 = vmul.f32 0.5, %v801
        %v803 = vsub.f32 1.5, %v802
        %v804 = vmul.f32 %v799, %v803
        %vm805 = vweird.f32 %v798
        %vm806 = vweird.f32 %v799
        %vm807 = vmor %vm805, %vm806
        %v808 = vsel %vm807, %v799, %v804
        %v809 = vmul.f32 %v792, %v808
        %v811 = vperm.slane %v779, 0
        %v813 = vmul.f32 %v809, %v811
        %v815 = vperm.slane %v780, 0
        %v817 = vadd.f32 %v813, %v815
        %v818 = vpack.c.bf16 %v817, %v817
        %v819 = vld [vmem:[#allocation3] sm:$0xf]
        %v820 = vld [vmem:[#allocation3 + $0x4] sm:$0xf]
        %v821 = vld [vmem:[#allocation3 + $0x8] sm:$0xf]
        %v822 = vld [vmem:[#allocation3 + $0xc] sm:$0xf]
        %v823 = vld [vmem:[%s6] sm:$0x1]
        %v825 = vperm.slane %v823, 0
        %v831 = vunpack.c.l.b16 %v819
        %v832 = vunpack.c.l.b16 %v820
        %v833 = vunpack.c.l.b16 %v821
        %v834 = vunpack.c.l.b16 %v822
        %v835 = vpack.c.b16 %v832, %v831
        %v836 = vpack.c.b16 %v834, %v833
        %v840 = vsel %vm476, %v818, 0
        %842 = vmatpush.bf16.msra.mxu0 0
        %843 = vmatpush.bf16.msra.mxu0 0
        %844 = vmatpush.bf16.msra.mxu0 0
        %845 = vmatpush.bf16.msra.mxu0 0
        %846 = vmatpush.bf16.msra.mxu0 0
        %847 = vmatpush.bf16.msra.mxu0 0
        %848 = vmatpush.bf16.msra.mxu0 %v836
        %849 = vmatpush.bf16.msra.mxu0 %v835
        %850 = vmatmul.bf16.gmra.mxu0 %v840
        %v851 = vpop.f32.mrf.mxu0
        %v852 = vadd.f32 %v825, %v851
        %v853 = vpop.f32.mrf.mxu0
        %854 = vdwg.mxu0
        %v855 = vmax.f32 %v852, 0.0
        %v856 = vpack.c.bf16 %v855, %v855
        %v857 = vld [vmem:[%s7] sm:$0xf]
        %v858 = vld [vmem:[%s7 + $0x4] sm:$0xf]
        %v859 = vld [vmem:[%s7 + $0x8] sm:$0xf]
        %v860 = vld [vmem:[%s7 + $0xc] sm:$0xf]
        %v861 = vld [vmem:[%s7 + $0x10] sm:$0xf]
        %v862 = vld [vmem:[%s7 + $0x14] sm:$0xf]
        %v863 = vld [vmem:[%s7 + $0x18] sm:$0xf]
        %v864 = vld [vmem:[%s7 + $0x1c] sm:$0xf]
        %v865 = vld [vmem:[%s8] sm:$0x1]
        %v867 = vperm.slane %v865, 0
        %v877 = vunpack.c.l.b16 %v857
        %v878 = vunpack.c.l.b16 %v858
        %v879 = vunpack.c.l.b16 %v859
        %v880 = vunpack.c.l.b16 %v860
        %v881 = vunpack.c.l.b16 %v861
        %v882 = vunpack.c.l.b16 %v862
        %v883 = vunpack.c.l.b16 %v863
        %v884 = vunpack.c.l.b16 %v864
        %v885 = vpack.c.b16 %v878, %v877
        %v886 = vpack.c.b16 %v880, %v879
        %v887 = vpack.c.b16 %v882, %v881
        %v888 = vpack.c.b16 %v884, %v883
        %vm893 = vcmask 523264
        %v895 = vsel %vm893, %v856, 0
        %897 = vmatpush.bf16.msra.mxu0 0
        %898 = vmatpush.bf16.msra.mxu0 0
        %899 = vmatpush.bf16.msra.mxu0 0
        %900 = vmatpush.bf16.msra.mxu0 0
        %901 = vmatpush.bf16.msra.mxu0 %v888
        %902 = vmatpush.bf16.msra.mxu0 %v887
        %903 = vmatpush.bf16.msra.mxu0 %v886
        %904 = vmatpush.bf16.msra.mxu0 %v885
        %905 = vmatmul.bf16.gmra.mxu0 %v895
        %v906 = vpop.f32.mrf.mxu0
        %v907 = vadd.f32 %v867, %v906
        %v908 = vpop.f32.mrf.mxu0
        %909 = vdwg.mxu0
        %v910 = vadd.f32 %v817, %v907
        %v911 = vld [vmem:[%s11] sm:$0x1]
        %v912 = vld [vmem:[%s12] sm:$0x1]
        %v913 = vsel %vm476, %v910, 0.0
        %914 = vadd.xlane.f32.xlu0 %v913
        %v915 = vpop.xlane.xlu0 %914
        %v916 = vmul.f32 %v915, %v790
        %v917 = vsub.f32 %v910, %v916
        %v918 = vmul.f32 %v917, %v917
        %v919 = vsel %vm476, %v918, 0.0
        %920 = vadd.xlane.f32.xlu0 %v919
        %v921 = vpop.xlane.xlu0 %920
        %v922 = vmul.f32 %v921, %v790
        %v923 = vadd.f32 %v922, 1e-05
        %v924 = vrsqrt.pop %v923
        %v925 = vmul.f32 %v924, %v923
        %v926 = vmul.f32 %v925, %v924
        %v927 = vmul.f32 0.5, %v926
        %v928 = vsub.f32 1.5, %v927
        %v929 = vmul.f32 %v924, %v928
        %vm930 = vweird.f32 %v923
        %vm931 = vweird.f32 %v924
        %vm932 = vmor %vm930, %vm931
        %v933 = vsel %vm932, %v924, %v929
        %v934 = vmul.f32 %v917, %v933
        %v936 = vperm.slane %v911, 0
        %v938 = vmul.f32 %v934, %v936
        %v940 = vperm.slane %v912, 0
        %v942 = vadd.f32 %v938, %v940
        %943 = vst.msk [vmem:[%s448] sm:$0xff] %vm476, %v942
        %s944 = sand.u32 %s314, 1
        %s945 = scalar_lea.sflag [#allocation5], %s944
        %s946 = sand.u32 %s314, 1
        %s947 = smul.addr %s946, 8
        %s948 = scalar_lea.vmem [#allocation6], %s947
        // Predicated region
        $region77: #{tpu_custom_call.1} parent=71 // pred_check
          %p949 = pneg %p324
        $region78: #{tpu_custom_call.1} parent=71 // pred_check_branch
          %951 = sbr.rel (%p949) target = $region80
        $region79: #{tpu_custom_call.1} parent=71 // pred_region
          %953 = vsyncadd %s945, 0
          %s954 = smul.addr %s28, 8
          %s955 = scalar_lea.hbm %s13, %s954
          %s957 = sshll.u32 %s948, 4
          %s958 = int_to_ptr.vmem [resolvable:$true] %s957
          %s959 = sshll.u32 %s955, 4
          %s960 = int_to_ptr.hbm [resolvable:$true] %s959
          %962 = dma.vmem_to_hbm [thread:$0]  %s958, 128, %s960, %s945
        $region80: #{tpu_custom_call.1} parent=71 // pred_fallthru
          _
      $region72: #{tpu_custom_call.1} parent=5 // pred_fallthru
        _
      %p963 = scmp.le.s32.totalorder 2, %s23
      // Predicated region
      $region81: #{tpu_custom_call.1} parent=5 // pred_check
        %p964 = pneg %p963
      $region82: #{tpu_custom_call.1} parent=5 // pred_check_branch
        %966 = sbr.rel (%p964) target = $region84
      $region83: #{tpu_custom_call.1} parent=5 // pred_region
        %s967 = ssub.s32 %s23, 2
        // Predicated region
        $region85: #{tpu_custom_call.1} parent=83 // pred_check
          %p968 = pneg %p330
        $region86: #{tpu_custom_call.1} parent=83 // pred_check_branch
          %970 = sbr.rel (%p968) target = $region88
        $region87: #{tpu_custom_call.1} parent=83 // pred_region
          %s971 = sand.u32 %s315, 1
          %s972 = scalar_lea.sflag [#allocation5], %s971
          %s973 = sand.u32 %s315, 1
          %s974 = smul.addr %s973, 8
          %s975 = scalar_lea.vmem [#allocation6], %s974
          %977 = dma.done %s972, 128
        $region88: #{tpu_custom_call.1} parent=83 // pred_fallthru
          _
      $region84: #{tpu_custom_call.1} parent=5 // pred_fallthru
        _
    $region6: #{tpu_custom_call.1} parent=1 // loop_footer
      %s27 = sadd.s32 1, %s23
    $region7: #{tpu_custom_call.1} parent=1 // loop_footer_branch
      %22 = sbr.rel target = $region3
    $region8: #{tpu_custom_call.1} parent=1 // loop_exit
      _
    %978 = vsyncpa [#allocation4], 1
    %s979 = scalar_lea.sflag [#allocation4], 1
    %980 = vsyncpa %s979, 1
    %981 = vsyncpa [#allocation5], 1
    %s982 = scalar_lea.sflag [#allocation5], 1
    %983 = vsyncpa %s982, 1

</llo_original>
